<compile_context>
chip_gen: v7x
topology: tpu7x:2x2x1
jax: 0.10.0
libtpu: 0.0.40
codegen_flags: <defaults>
</compile_context>

<pallas_src>
import jax
import jax.numpy as jnp
from jax.experimental import pallas as pl
from jax.experimental.pallas import tpu as pltpu

_TILE_BYTES = 2 * 1024 * 1024   # target bytes per VMEM buffer (~2 MiB)
_TINY_BYTES = 64 * 1024         # below this, skip Pallas (launch overhead dominates)
_VMEM_LIMIT = 32 * 1024 * 1024  # explicit scoped-VMEM limit (safe on v5e/v6e/v7x)


def _transpose_tile_kernel(x_ref, o_ref):
    # x_ref: (tT, tC) VMEM tile ; o_ref: (tC, tT) VMEM tile.
    # Plain 2-D minor-dim transpose -> maps directly onto XLU vxpose.
    o_ref[...] = x_ref[...].T


def _transpose_batched_kernel(x_ref, o_ref):
    # x_ref: (nb, T, C) ; o_ref: (nb, C, T).  Batched minor-dim transpose.
    o_ref[...] = jnp.swapaxes(x_ref[...], 1, 2)


def _tile_targets(itemsize: int) -> tuple:
    """Byte-budgeted (tT, tC) targets, biased toward a long write dim tT."""
    elems = _TILE_BYTES // itemsize          # f32: 512K, bf16: 1M, int8: 2M
    t_t = 2048 if itemsize == 1 else 1024
    t_c = max(128, elems // t_t)
    return t_t, t_c


def _tile_dim(d: int, target: int) -> int:
    """Pick a tile size for one dim: lane-dense (128-multiple) unless full extent."""
    if d > target:
        return target
    if d < 128 or d % 128 == 0:
        return d                       # full extent: always layout-legal
    return 128 * (d // 128)            # lane-dense tile; cdiv grid covers the tail


def transpose_last_two(x: jax.Array) -> jax.Array:
    """Pallas equivalent of torch.transpose(x, 1, 2) for a 3-D (B, T, C) array."""
    B, T, C = x.shape
    itemsize = x.dtype.itemsize
    total_bytes = B * T * C * itemsize

    # Truly tiny activations: per-step overhead and masked stores dominate;
    # XLA's transpose is already optimal, don't pay kernel-launch cost.
    if total_bytes <= _TINY_BYTES:
        return jnp.swapaxes(x, 1, 2)

    t_t_max, t_c_max = _tile_targets(itemsize)
    cost = pl.CostEstimate(
        flops=0, transcendentals=0, bytes_accessed=2 * total_bytes)

    if T <= t_t_max and C <= t_c_max:
        # Small/medium (T, C): fold batch into the block so step overhead and
        # DMA descriptors are amortized over several batch slabs.
        slab_bytes = max(1, T * C * itemsize)
        nb = max(1, min(B, _TILE_BYTES // slab_bytes))
        return pl.pallas_call(
            _transpose_batched_kernel,
            out_shape=jax.ShapeDtypeStruct((B, C, T), x.dtype),
            grid=(pl.cdiv(B, nb),),
            in_specs=[pl.BlockSpec((nb, T, C), lambda b: (b, 0, 0))],
            out_specs=pl.BlockSpec((nb, C, T), lambda b: (b, 0, 0)),
            compiler_params=pltpu.CompilerParams(
                dimension_semantics=("parallel",),
                vmem_limit_bytes=_VMEM_LIMIT,
            ),
            cost_estimate=cost,
        )(x)

    # Large (T, C): tile both dims, squeeze the batch dim out of the block.
    t_t = _tile_dim(T, t_t_max)
    t_c = _tile_dim(C, t_c_max)
    # ti innermost: successive output tiles are adjacent along the output's
    # contiguous T axis -> sequential HBM write stream (write-side efficiency
    # is the gap to the v7x roofline).  All axes parallel for megacore split.
    grid = (B, pl.cdiv(C, t_c), pl.cdiv(T, t_t))
    return pl.pallas_call(
        _transpose_tile_kernel,
        out_shape=jax.ShapeDtypeStruct((B, C, T), x.dtype),
        grid=grid,
        # Leading None squeezes the batch dim out of the kernel-visible tile.
        in_specs=[pl.BlockSpec((None, t_t, t_c), lambda b, ci, ti: (b, ti, ci))],
        out_specs=pl.BlockSpec((None, t_c, t_t), lambda b, ci, ti: (b, ci, ti)),
        compiler_params=pltpu.CompilerParams(
            dimension_semantics=("parallel", "parallel", "parallel"),
            vmem_limit_bytes=_VMEM_LIMIT,
        ),
        cost_estimate=cost,
    )(x)


class Transpose:
    """JAX/Pallas port of the PyTorch Transpose module (dims must be (1, 2))."""

    def __init__(self, dims):
        assert len(dims) == 2, "dims must be a tuple of two dimensions"
        # The conformer model only ever uses (1, 2); the kernel handles that case.
        assert tuple(sorted(dims)) == (1, 2), "this Pallas port supports dims=(1, 2)"
        self.dims = dims

    def __call__(self, x):
        return transpose_last_two(x)


if __name__ == "__main__":
    key = jax.random.PRNGKey(0)
    mod = Transpose(dims=(1, 2))

    # 1) Module's actual small shapes: batch=2, seq=8, hidden=32 (tiny path).
    B, T, C = 2, 8, 32
    x = jax.random.normal(key, (B, T, C), dtype=jnp.float32)
    out = jax.block_until_ready(mod(x))
    assert out.shape == (B, C, T) and out.dtype == x.dtype
    assert bool(jnp.array_equal(out, jnp.swapaxes(x, 1, 2)))

    # 2) Medium f32, non-128-multiple seq -> batch-folded Pallas path.
    k1 = jax.random.PRNGKey(1)
    x1 = jax.random.normal(k1, (2, 200, 384), dtype=jnp.float32)
    out1 = jax.block_until_ready(mod(x1))
    assert out1.shape == (2, 384, 200)
    assert bool(jnp.array_equal(out1, jnp.swapaxes(x1, 1, 2)))

    # 3) bf16, long sequence -> tiled Pallas path with a tail block along T.
    k2 = jax.random.PRNGKey(2)
    x2 = jax.random.normal(k2, (1, 1280, 640), dtype=jnp.bfloat16)
    out2 = jax.block_until_ready(mod(x2))
    assert out2.shape == (1, 640, 1280)
    assert bool(jnp.array_equal(out2, jnp.swapaxes(x2, 1, 2)))

    # 4) f32, ragged dims -> tiled path exercising the lane-density guard
    #    (tT = 640 for T = 700) and ragged tails on both grid axes.
    k3 = jax.random.PRNGKey(3)
    x3 = jax.random.normal(k3, (2, 700, 900), dtype=jnp.float32)
    out3 = jax.block_until_ready(mod(x3))
    assert out3.shape == (2, 900, 700)
    assert bool(jnp.array_equal(out3, jnp.swapaxes(x3, 1, 2)))

    print("KERNEL_OK")
</pallas_src>

<mosaic_0001>
module attributes {stable_mosaic.version = 11 : i64} {
  func.func @_transpose_batched_kernel(%arg0: i32, %arg1: memref<2x200x384xf32, #tpu.memory_space<vmem>>, %arg2: memref<2x384x200xf32, #tpu.memory_space<vmem>>) attributes {dimension_semantics = [#tpu.dimension_semantics<parallel>], iteration_bounds = array<i64: 1>, scalar_prefetch = 0 : i64, scratch_operands = 0 : i64, tpu.core_type = #tpu.core_type<tc>, window_params = [{transform_indices = @transform_0, window_bounds = array<i64: 2, 200, 384>}, {transform_indices = @transform_1, window_bounds = array<i64: 2, 384, 200>}]} {
    %c0 = arith.constant 0 : index
    %c0_0 = arith.constant 0 : index
    %c0_1 = arith.constant 0 : index
    %0 = vector.load %arg1[%c0, %c0_0, %c0_1] : memref<2x200x384xf32, #tpu.memory_space<vmem>>, vector<2x200x384xf32>
    %1 = tpu.transpose %0, [0, 2, 1] : vector<2x200x384xf32> -> vector<2x384x200xf32>
    %c0_2 = arith.constant 0 : index
    %c0_3 = arith.constant 0 : index
    %c0_4 = arith.constant 0 : index
    %2 = vector.load %arg2[%c0_2, %c0_3, %c0_4] : memref<2x384x200xf32, #tpu.memory_space<vmem>>, vector<2x384x200xf32>
    tpu.vector_store %arg2[%c0_2, %c0_3, %c0_4], %1 {strides = array<i32>} : memref<2x384x200xf32, #tpu.memory_space<vmem>>, vector<2x384x200xf32>,
    return
  }
  func.func @transform_0(%arg0: i32) -> (i32, i32, i32) {
    %c0_i32 = arith.constant 0 : i32
    %c0_i32_0 = arith.constant 0 : i32
    %c0_i32_1 = arith.constant 0 : i32
    return %arg0, %c0_i32, %c0_i32_0 : i32, i32, i32
  }
  func.func @transform_1(%arg0: i32) -> (i32, i32, i32) {
    %c0_i32 = arith.constant 0 : i32
    %c0_i32_0 = arith.constant 0 : i32
    %c0_i32_1 = arith.constant 0 : i32
    return %arg0, %c0_i32, %c0_i32_0 : i32, i32, i32
  }
}

</mosaic_0001>

<llo_original>
// kernel: tpu_custom_call.1
$region0: #{tpu_custom_call.1}
  #allocation0 [shape = 'u32[]', space=smem, size = 0x4, offset = 0x4, fixed_abs, tag = 'smem constant byte address 0x4 - core index']
  #allocation1 [shape = 'u32[144,128]{1,0:T(1,128)}', space=vmem, size = 0x12000, scoped, tag = 'internal scratch']
  %s0 = inlined_call_operand.hbm [shape: f32[2,200,384], index: 0, kind: input, shape index: {}]
  %s1 = inlined_call_operand.vmem [shape: f32[2,384,200], index: 1, kind: output, shape index: {}]
  %s2 = sld [smem:[#allocation0]]
  $region18: #{tpu_custom_call.1} parent=0
    _
  %s4 = ssub.s32 1, %s2
  %s5 = scalar_select 0, %s4, %s2
  $region1: #{tpu_custom_call.1} parent=0
    #allocation2 [shape = 'u8[614400]{0}', space=vmem, size = 0x96000, scoped, tag = 'input window, operand 0, single buffered']
    #allocation3 [shape = 's32[1]{0}', space=sflag, size = 0x4, scoped, tag = 'scoped memory for tpu_custom_call.1']
    %6 = vsyncpa [#allocation3], 0
    // Predicated region
    $region2: #{tpu_custom_call.1} parent=1 // pred_check
      _
    $region3: #{tpu_custom_call.1} parent=1 // pred_check_branch
      %8 = sbr.rel (0) target = $region5
    $region4: #{tpu_custom_call.1} parent=1 // pred_region
      %s10 = ssub.s32 19200, 19200
      %11 = vsyncadd [#allocation3], %s10
      %s12 = sshll.u32 [#allocation2], 4
      %s13 = int_to_ptr.vmem [resolvable:$true] %s12
      %18 = dma.hbm_to_vmem [thread:$0]  %s0, 19200, %s13, [#allocation3], 384, 384, 24
    $region5: #{tpu_custom_call.1} parent=1 // pred_fallthru
      _
    // Predicated region
    $region6: #{tpu_custom_call.1} parent=1 // pred_check
      _
    $region7: #{tpu_custom_call.1} parent=1 // pred_check_branch
      %20 = sbr.rel (0) target = $region9
    $region8: #{tpu_custom_call.1} parent=1 // pred_region
      %21 = dma.done [#allocation3], 19200
    $region9: #{tpu_custom_call.1} parent=1 // pred_fallthru
      _
    %v22 = vld [vmem:[#allocation2] sm:$0xff]
    %v23 = vld [vmem:[#allocation2 + $0x8] sm:$0xff]
    %v24 = vld [vmem:[#allocation2 + $0x10] sm:$0xff]
    %v25 = vld [vmem:[#allocation2 + $0x18] sm:$0xff]
    %v26 = vld [vmem:[#allocation2 + $0x20] sm:$0xff]
    %v27 = vld [vmem:[#allocation2 + $0x28] sm:$0xff]
    %v28 = vld [vmem:[#allocation2 + $0x30] sm:$0xff]
    %v29 = vld [vmem:[#allocation2 + $0x38] sm:$0xff]
    %v30 = vld [vmem:[#allocation2 + $0x40] sm:$0xff]
    %v31 = vld [vmem:[#allocation2 + $0x48] sm:$0xff]
    %v32 = vld [vmem:[#allocation2 + $0x50] sm:$0xff]
    %v33 = vld [vmem:[#allocation2 + $0x58] sm:$0xff]
    %v34 = vld [vmem:[#allocation2 + $0x60] sm:$0xff]
    %v35 = vld [vmem:[#allocation2 + $0x68] sm:$0xff]
    %v36 = vld [vmem:[#allocation2 + $0x70] sm:$0xff]
    %v37 = vld [vmem:[#allocation2 + $0x78] sm:$0xff]
    %v38 = vld [vmem:[#allocation2 + $0x80] sm:$0xff]
    %v39 = vld [vmem:[#allocation2 + $0x88] sm:$0xff]
    %v40 = vld [vmem:[#allocation2 + $0x90] sm:$0xff]
    %v41 = vld [vmem:[#allocation2 + $0x98] sm:$0xff]
    %v42 = vld [vmem:[#allocation2 + $0xa0] sm:$0xff]
    %v43 = vld [vmem:[#allocation2 + $0xa8] sm:$0xff]
    %v44 = vld [vmem:[#allocation2 + $0xb0] sm:$0xff]
    %v45 = vld [vmem:[#allocation2 + $0xb8] sm:$0xff]
    %v46 = vld [vmem:[#allocation2 + $0xc0] sm:$0xff]
    %v47 = vld [vmem:[#allocation2 + $0xc8] sm:$0xff]
    %v48 = vld [vmem:[#allocation2 + $0xd0] sm:$0xff]
    %v49 = vld [vmem:[#allocation2 + $0xd8] sm:$0xff]
    %v50 = vld [vmem:[#allocation2 + $0xe0] sm:$0xff]
    %v51 = vld [vmem:[#allocation2 + $0xe8] sm:$0xff]
    %v52 = vld [vmem:[#allocation2 + $0xf0] sm:$0xff]
    %v53 = vld [vmem:[#allocation2 + $0xf8] sm:$0xff]
    %v54 = vld [vmem:[#allocation2 + $0x100] sm:$0xff]
    %v55 = vld [vmem:[#allocation2 + $0x108] sm:$0xff]
    %v56 = vld [vmem:[#allocation2 + $0x110] sm:$0xff]
    %v57 = vld [vmem:[#allocation2 + $0x118] sm:$0xff]
    %v58 = vld [vmem:[#allocation2 + $0x120] sm:$0xff]
    %v59 = vld [vmem:[#allocation2 + $0x128] sm:$0xff]
    %v60 = vld [vmem:[#allocation2 + $0x130] sm:$0xff]
    %v61 = vld [vmem:[#allocation2 + $0x138] sm:$0xff]
    %v62 = vld [vmem:[#allocation2 + $0x140] sm:$0xff]
    %v63 = vld [vmem:[#allocation2 + $0x148] sm:$0xff]
    %v64 = vld [vmem:[#allocation2 + $0x150] sm:$0xff]
    %v65 = vld [vmem:[#allocation2 + $0x158] sm:$0xff]
    %v66 = vld [vmem:[#allocation2 + $0x160] sm:$0xff]
    %v67 = vld [vmem:[#allocation2 + $0x168] sm:$0xff]
    %v68 = vld [vmem:[#allocation2 + $0x170] sm:$0xff]
    %v69 = vld [vmem:[#allocation2 + $0x178] sm:$0xff]
    %v70 = vld [vmem:[#allocation2 + $0x180] sm:$0xff]
    %v71 = vld [vmem:[#allocation2 + $0x188] sm:$0xff]
    %v72 = vld [vmem:[#allocation2 + $0x190] sm:$0xff]
    %v73 = vld [vmem:[#allocation2 + $0x198] sm:$0xff]
    %v74 = vld [vmem:[#allocation2 + $0x1a0] sm:$0xff]
    %v75 = vld [vmem:[#allocation2 + $0x1a8] sm:$0xff]
    %v76 = vld [vmem:[#allocation2 + $0x1b0] sm:$0xff]
    %v77 = vld [vmem:[#allocation2 + $0x1b8] sm:$0xff]
    %v78 = vld [vmem:[#allocation2 + $0x1c0] sm:$0xff]
    %v79 = vld [vmem:[#allocation2 + $0x1c8] sm:$0xff]
    %v80 = vld [vmem:[#allocation2 + $0x1d0] sm:$0xff]
    %v81 = vld [vmem:[#allocation2 + $0x1d8] sm:$0xff]
    %v82 = vld [vmem:[#allocation2 + $0x1e0] sm:$0xff]
    %v83 = vld [vmem:[#allocation2 + $0x1e8] sm:$0xff]
    %v84 = vld [vmem:[#allocation2 + $0x1f0] sm:$0xff]
    %v85 = vld [vmem:[#allocation2 + $0x1f8] sm:$0xff]
    %v86 = vld [vmem:[#allocation2 + $0x200] sm:$0xff]
    %v87 = vld [vmem:[#allocation2 + $0x208] sm:$0xff]
    %v88 = vld [vmem:[#allocation2 + $0x210] sm:$0xff]
    %v89 = vld [vmem:[#allocation2 + $0x218] sm:$0xff]
    %v90 = vld [vmem:[#allocation2 + $0x220] sm:$0xff]
    %v91 = vld [vmem:[#allocation2 + $0x228] sm:$0xff]
    %v92 = vld [vmem:[#allocation2 + $0x230] sm:$0xff]
    %v93 = vld [vmem:[#allocation2 + $0x238] sm:$0xff]
    %v94 = vld [vmem:[#allocation2 + $0x240] sm:$0xff]
    %v95 = vld [vmem:[#allocation2 + $0x248] sm:$0xff]
    %v96 = vld [vmem:[#allocation2 + $0x250] sm:$0xff]
    %v97 = vld [vmem:[#allocation2 + $0x258] sm:$0xff]
    %v98 = vld [vmem:[#allocation2 + $0x260] sm:$0xff]
    %v99 = vld [vmem:[#allocation2 + $0x268] sm:$0xff]
    %v100 = vld [vmem:[#allocation2 + $0x270] sm:$0xff]
    %v101 = vld [vmem:[#allocation2 + $0x278] sm:$0xff]
    %v102 = vld [vmem:[#allocation2 + $0x280] sm:$0xff]
    %v103 = vld [vmem:[#allocation2 + $0x288] sm:$0xff]
    %v104 = vld [vmem:[#allocation2 + $0x290] sm:$0xff]
    %v105 = vld [vmem:[#allocation2 + $0x298] sm:$0xff]
    %v106 = vld [vmem:[#allocation2 + $0x2a0] sm:$0xff]
    %v107 = vld [vmem:[#allocation2 + $0x2a8] sm:$0xff]
    %v108 = vld [vmem:[#allocation2 + $0x2b0] sm:$0xff]
    %v109 = vld [vmem:[#allocation2 + $0x2b8] sm:$0xff]
    %v110 = vld [vmem:[#allocation2 + $0x2c0] sm:$0xff]
    %v111 = vld [vmem:[#allocation2 + $0x2c8] sm:$0xff]
    %v112 = vld [vmem:[#allocation2 + $0x2d0] sm:$0xff]
    %v113 = vld [vmem:[#allocation2 + $0x2d8] sm:$0xff]
    %v114 = vld [vmem:[#allocation2 + $0x2e0] sm:$0xff]
    %v115 = vld [vmem:[#allocation2 + $0x2e8] sm:$0xff]
    %v116 = vld [vmem:[#allocation2 + $0x2f0] sm:$0xff]
    %v117 = vld [vmem:[#allocation2 + $0x2f8] sm:$0xff]
    %v118 = vld [vmem:[#allocation2 + $0x300] sm:$0xff]
    %v119 = vld [vmem:[#allocation2 + $0x308] sm:$0xff]
    %v120 = vld [vmem:[#allocation2 + $0x310] sm:$0xff]
    %v121 = vld [vmem:[#allocation2 + $0x318] sm:$0xff]
    %v122 = vld [vmem:[#allocation2 + $0x320] sm:$0xff]
    %v123 = vld [vmem:[#allocation2 + $0x328] sm:$0xff]
    %v124 = vld [vmem:[#allocation2 + $0x330] sm:$0xff]
    %v125 = vld [vmem:[#allocation2 + $0x338] sm:$0xff]
    %v126 = vld [vmem:[#allocation2 + $0x340] sm:$0xff]
    %v127 = vld [vmem:[#allocation2 + $0x348] sm:$0xff]
    %v128 = vld [vmem:[#allocation2 + $0x350] sm:$0xff]
    %v129 = vld [vmem:[#allocation2 + $0x358] sm:$0xff]
    %v130 = vld [vmem:[#allocation2 + $0x360] sm:$0xff]
    %v131 = vld [vmem:[#allocation2 + $0x368] sm:$0xff]
    %v132 = vld [vmem:[#allocation2 + $0x370] sm:$0xff]
    %v133 = vld [vmem:[#allocation2 + $0x378] sm:$0xff]
    %v134 = vld [vmem:[#allocation2 + $0x380] sm:$0xff]
    %v135 = vld [vmem:[#allocation2 + $0x388] sm:$0xff]
    %v136 = vld [vmem:[#allocation2 + $0x390] sm:$0xff]
    %v137 = vld [vmem:[#allocation2 + $0x398] sm:$0xff]
    %v138 = vld [vmem:[#allocation2 + $0x3a0] sm:$0xff]
    %v139 = vld [vmem:[#allocation2 + $0x3a8] sm:$0xff]
    %v140 = vld [vmem:[#allocation2 + $0x3b0] sm:$0xff]
    %v141 = vld [vmem:[#allocation2 + $0x3b8] sm:$0xff]
    %v142 = vld [vmem:[#allocation2 + $0x3c0] sm:$0xff]
    %v143 = vld [vmem:[#allocation2 + $0x3c8] sm:$0xff]
    %v144 = vld [vmem:[#allocation2 + $0x3d0] sm:$0xff]
    %v145 = vld [vmem:[#allocation2 + $0x3d8] sm:$0xff]
    %v146 = vld [vmem:[#allocation2 + $0x3e0] sm:$0xff]
    %v147 = vld [vmem:[#allocation2 + $0x3e8] sm:$0xff]
    %v148 = vld [vmem:[#allocation2 + $0x3f0] sm:$0xff]
    %v149 = vld [vmem:[#allocation2 + $0x3f8] sm:$0xff]
    %v150 = vld [vmem:[#allocation2 + $0x400] sm:$0xff]
    %v151 = vld [vmem:[#allocation2 + $0x408] sm:$0xff]
    %v152 = vld [vmem:[#allocation2 + $0x410] sm:$0xff]
    %v153 = vld [vmem:[#allocation2 + $0x418] sm:$0xff]
    %v154 = vld [vmem:[#allocation2 + $0x420] sm:$0xff]
    %v155 = vld [vmem:[#allocation2 + $0x428] sm:$0xff]
    %v156 = vld [vmem:[#allocation2 + $0x430] sm:$0xff]
    %v157 = vld [vmem:[#allocation2 + $0x438] sm:$0xff]
    %v158 = vld [vmem:[#allocation2 + $0x440] sm:$0xff]
    %v159 = vld [vmem:[#allocation2 + $0x448] sm:$0xff]
    %v160 = vld [vmem:[#allocation2 + $0x450] sm:$0xff]
    %v161 = vld [vmem:[#allocation2 + $0x458] sm:$0xff]
    %v162 = vld [vmem:[#allocation2 + $0x460] sm:$0xff]
    %v163 = vld [vmem:[#allocation2 + $0x468] sm:$0xff]
    %v164 = vld [vmem:[#allocation2 + $0x470] sm:$0xff]
    %v165 = vld [vmem:[#allocation2 + $0x478] sm:$0xff]
    %v166 = vld [vmem:[#allocation2 + $0x480] sm:$0xff]
    %v167 = vld [vmem:[#allocation2 + $0x488] sm:$0xff]
    %v168 = vld [vmem:[#allocation2 + $0x490] sm:$0xff]
    %v169 = vld [vmem:[#allocation2 + $0x498] sm:$0xff]
    %v170 = vld [vmem:[#allocation2 + $0x4a0] sm:$0xff]
    %v171 = vld [vmem:[#allocation2 + $0x4a8] sm:$0xff]
    %172 = vxpose.xlu0.b32.start [1/16] %v22, 128
    %173 = vxpose.xlu0.b32.cont [2/16] %v25, 128
    %174 = vxpose.xlu0.b32.cont [3/16] %v28, 128
    %175 = vxpose.xlu0.b32.cont [4/16] %v31, 128
    %176 = vxpose.xlu0.b32.cont [5/16] %v34, 128
    %177 = vxpose.xlu0.b32.cont [6/16] %v37, 128
    %178 = vxpose.xlu0.b32.cont [7/16] %v40, 128
    %179 = vxpose.xlu0.b32.cont [8/16] %v43, 128
    %180 = vxpose.xlu0.b32.cont [9/16] %v46, 128
    %181 = vxpose.xlu0.b32.cont [10/16] %v49, 128
    %182 = vxpose.xlu0.b32.cont [11/16] %v52, 128
    %183 = vxpose.xlu0.b32.cont [12/16] %v55, 128
    %184 = vxpose.xlu0.b32.cont [13/16] %v58, 128
    %185 = vxpose.xlu0.b32.cont [14/16] %v61, 128
    %186 = vxpose.xlu0.b32.cont [15/16] %v64, 128
    %187 = vxpose.xlu0.b32.end [16/16] %v67, 128
    %v188 = vpop.trf.xlu0
    %v189 = vpop.trf.xlu0
    %v190 = vpop.trf.xlu0
    %v191 = vpop.trf.xlu0
    %v192 = vpop.trf.xlu0
    %v193 = vpop.trf.xlu0
    %v194 = vpop.trf.xlu0
    %v195 = vpop.trf.xlu0
    %v196 = vpop.trf.xlu0
    %v197 = vpop.trf.xlu0
    %v198 = vpop.trf.xlu0
    %v199 = vpop.trf.xlu0
    %v200 = vpop.trf.xlu0
    %v201 = vpop.trf.xlu0
    %v202 = vpop.trf.xlu0
    %v203 = vpop.trf.xlu0
    %204 = vxpose.xlu0.b32.start [1/16] %v23, 128
    %205 = vxpose.xlu0.b32.cont [2/16] %v26, 128
    %206 = vxpose.xlu0.b32.cont [3/16] %v29, 128
    %207 = vxpose.xlu0.b32.cont [4/16] %v32, 128
    %208 = vxpose.xlu0.b32.cont [5/16] %v35, 128
    %209 = vxpose.xlu0.b32.cont [6/16] %v38, 128
    %210 = vxpose.xlu0.b32.cont [7/16] %v41, 128
    %211 = vxpose.xlu0.b32.cont [8/16] %v44, 128
    %212 = vxpose.xlu0.b32.cont [9/16] %v47, 128
    %213 = vxpose.xlu0.b32.cont [10/16] %v50, 128
    %214 = vxpose.xlu0.b32.cont [11/16] %v53, 128
    %215 = vxpose.xlu0.b32.cont [12/16] %v56, 128
    %216 = vxpose.xlu0.b32.cont [13/16] %v59, 128
    %217 = vxpose.xlu0.b32.cont [14/16] %v62, 128
    %218 = vxpose.xlu0.b32.cont [15/16] %v65, 128
    %219 = vxpose.xlu0.b32.end [16/16] %v68, 128
    %v220 = vpop.trf.xlu0
    %v221 = vpop.trf.xlu0
    %v222 = vpop.trf.xlu0
    %v223 = vpop.trf.xlu0
    %v224 = vpop.trf.xlu0
    %v225 = vpop.trf.xlu0
    %v226 = vpop.trf.xlu0
    %v227 = vpop.trf.xlu0
    %v228 = vpop.trf.xlu0
    %v229 = vpop.trf.xlu0
    %v230 = vpop.trf.xlu0
    %v231 = vpop.trf.xlu0
    %v232 = vpop.trf.xlu0
    %v233 = vpop.trf.xlu0
    %v234 = vpop.trf.xlu0
    %v235 = vpop.trf.xlu0
    %236 = vxpose.xlu0.b32.start [1/16] %v24, 128
    %237 = vxpose.xlu0.b32.cont [2/16] %v27, 128
    %238 = vxpose.xlu0.b32.cont [3/16] %v30, 128
    %239 = vxpose.xlu0.b32.cont [4/16] %v33, 128
    %240 = vxpose.xlu0.b32.cont [5/16] %v36, 128
    %241 = vxpose.xlu0.b32.cont [6/16] %v39, 128
    %242 = vxpose.xlu0.b32.cont [7/16] %v42, 128
    %243 = vxpose.xlu0.b32.cont [8/16] %v45, 128
    %244 = vxpose.xlu0.b32.cont [9/16] %v48, 128
    %245 = vxpose.xlu0.b32.cont [10/16] %v51, 128
    %246 = vxpose.xlu0.b32.cont [11/16] %v54, 128
    %247 = vxpose.xlu0.b32.cont [12/16] %v57, 128
    %248 = vxpose.xlu0.b32.cont [13/16] %v60, 128
    %249 = vxpose.xlu0.b32.cont [14/16] %v63, 128
    %250 = vxpose.xlu0.b32.cont [15/16] %v66, 128
    %251 = vxpose.xlu0.b32.end [16/16] %v69, 128
    %v252 = vpop.trf.xlu0
    %v253 = vpop.trf.xlu0
    %v254 = vpop.trf.xlu0
    %v255 = vpop.trf.xlu0
    %v256 = vpop.trf.xlu0
    %v257 = vpop.trf.xlu0
    %v258 = vpop.trf.xlu0
    %v259 = vpop.trf.xlu0
    %v260 = vpop.trf.xlu0
    %v261 = vpop.trf.xlu0
    %v262 = vpop.trf.xlu0
    %v263 = vpop.trf.xlu0
    %v264 = vpop.trf.xlu0
    %v265 = vpop.trf.xlu0
    %v266 = vpop.trf.xlu0
    %v267 = vpop.trf.xlu0
    %268 = vxpose.xlu0.b32.start [1/16] %v70, 128
    %269 = vxpose.xlu0.b32.cont [2/16] %v73, 128
    %270 = vxpose.xlu0.b32.cont [3/16] %v76, 128
    %271 = vxpose.xlu0.b32.cont [4/16] %v79, 128
    %272 = vxpose.xlu0.b32.cont [5/16] %v82, 128
    %273 = vxpose.xlu0.b32.cont [6/16] %v85, 128
    %274 = vxpose.xlu0.b32.cont [7/16] %v88, 128
    %275 = vxpose.xlu0.b32.cont [8/16] %v91, 128
    %276 = vxpose.xlu0.b32.cont [9/16] %v94, 128
    %277 = vxpose.xlu0.b32.cont [10/16] 0.0, 128
    %278 = vxpose.xlu0.b32.cont [11/16] 0.0, 128
    %279 = vxpose.xlu0.b32.cont [12/16] 0.0, 128
    %280 = vxpose.xlu0.b32.cont [13/16] 0.0, 128
    %281 = vxpose.xlu0.b32.cont [14/16] 0.0, 128
    %282 = vxpose.xlu0.b32.cont [15/16] 0.0, 128
    %283 = vxpose.xlu0.b32.end [16/16] 0.0, 128
    %v284 = vpop.trf.xlu0
    %v285 = vpop.trf.xlu0
    %v286 = vpop.trf.xlu0
    %v287 = vpop.trf.xlu0
    %v288 = vpop.trf.xlu0
    %v289 = vpop.trf.xlu0
    %v290 = vpop.trf.xlu0
    %v291 = vpop.trf.xlu0
    %v292 = vpop.trf.xlu0
    %v293 = vpop.trf.xlu0
    %v294 = vpop.trf.xlu0
    %v295 = vpop.trf.xlu0
    %v296 = vpop.trf.xlu0
    %v297 = vpop.trf.xlu0
    %v298 = vpop.trf.xlu0
    %v299 = vpop.trf.xlu0
    %300 = vxpose.xlu0.b32.start [1/16] %v71, 128
    %301 = vxpose.xlu0.b32.cont [2/16] %v74, 128
    %302 = vxpose.xlu0.b32.cont [3/16] %v77, 128
    %303 = vxpose.xlu0.b32.cont [4/16] %v80, 128
    %304 = vxpose.xlu0.b32.cont [5/16] %v83, 128
    %305 = vxpose.xlu0.b32.cont [6/16] %v86, 128
    %306 = vxpose.xlu0.b32.cont [7/16] %v89, 128
    %307 = vxpose.xlu0.b32.cont [8/16] %v92, 128
    %308 = vxpose.xlu0.b32.cont [9/16] %v95, 128
    %309 = vxpose.xlu0.b32.cont [10/16] 0.0, 128
    %310 = vxpose.xlu0.b32.cont [11/16] 0.0, 128
    %311 = vxpose.xlu0.b32.cont [12/16] 0.0, 128
    %312 = vxpose.xlu0.b32.cont [13/16] 0.0, 128
    %313 = vxpose.xlu0.b32.cont [14/16] 0.0, 128
    %314 = vxpose.xlu0.b32.cont [15/16] 0.0, 128
    %315 = vxpose.xlu0.b32.end [16/16] 0.0, 128
    %v316 = vpop.trf.xlu0
    %v317 = vpop.trf.xlu0
    %v318 = vpop.trf.xlu0
    %v319 = vpop.trf.xlu0
    %v320 = vpop.trf.xlu0
    %v321 = vpop.trf.xlu0
    %v322 = vpop.trf.xlu0
    %v323 = vpop.trf.xlu0
    %v324 = vpop.trf.xlu0
    %v325 = vpop.trf.xlu0
    %v326 = vpop.trf.xlu0
    %v327 = vpop.trf.xlu0
    %v328 = vpop.trf.xlu0
    %v329 = vpop.trf.xlu0
    %v330 = vpop.trf.xlu0
    %v331 = vpop.trf.xlu0
    %332 = vxpose.xlu0.b32.start [1/16] %v72, 128
    %333 = vxpose.xlu0.b32.cont [2/16] %v75, 128
    %334 = vxpose.xlu0.b32.cont [3/16] %v78, 128
    %335 = vxpose.xlu0.b32.cont [4/16] %v81, 128
    %336 = vxpose.xlu0.b32.cont [5/16] %v84, 128
    %337 = vxpose.xlu0.b32.cont [6/16] %v87, 128
    %338 = vxpose.xlu0.b32.cont [7/16] %v90, 128
    %339 = vxpose.xlu0.b32.cont [8/16] %v93, 128
    %340 = vxpose.xlu0.b32.cont [9/16] %v96, 128
    %341 = vxpose.xlu0.b32.cont [10/16] 0.0, 128
    %342 = vxpose.xlu0.b32.cont [11/16] 0.0, 128
    %343 = vxpose.xlu0.b32.cont [12/16] 0.0, 128
    %344 = vxpose.xlu0.b32.cont [13/16] 0.0, 128
    %345 = vxpose.xlu0.b32.cont [14/16] 0.0, 128
    %346 = vxpose.xlu0.b32.cont [15/16] 0.0, 128
    %347 = vxpose.xlu0.b32.end [16/16] 0.0, 128
    %v348 = vpop.trf.xlu0
    %v349 = vpop.trf.xlu0
    %v350 = vpop.trf.xlu0
    %v351 = vpop.trf.xlu0
    %v352 = vpop.trf.xlu0
    %v353 = vpop.trf.xlu0
    %v354 = vpop.trf.xlu0
    %v355 = vpop.trf.xlu0
    %v356 = vpop.trf.xlu0
    %v357 = vpop.trf.xlu0
    %v358 = vpop.trf.xlu0
    %v359 = vpop.trf.xlu0
    %v360 = vpop.trf.xlu0
    %v361 = vpop.trf.xlu0
    %v362 = vpop.trf.xlu0
    %v363 = vpop.trf.xlu0
    %364 = vxpose.xlu0.b32.start [1/16] %v97, 128
    %365 = vxpose.xlu0.b32.cont [2/16] %v100, 128
    %366 = vxpose.xlu0.b32.cont [3/16] %v103, 128
    %367 = vxpose.xlu0.b32.cont [4/16] %v106, 128
    %368 = vxpose.xlu0.b32.cont [5/16] %v109, 128
    %369 = vxpose.xlu0.b32.cont [6/16] %v112, 128
    %370 = vxpose.xlu0.b32.cont [7/16] %v115, 128
    %371 = vxpose.xlu0.b32.cont [8/16] %v118, 128
    %372 = vxpose.xlu0.b32.cont [9/16] %v121, 128
    %373 = vxpose.xlu0.b32.cont [10/16] %v124, 128
    %374 = vxpose.xlu0.b32.cont [11/16] %v127, 128
    %375 = vxpose.xlu0.b32.cont [12/16] %v130, 128
    %376 = vxpose.xlu0.b32.cont [13/16] %v133, 128
    %377 = vxpose.xlu0.b32.cont [14/16] %v136, 128
    %378 = vxpose.xlu0.b32.cont [15/16] %v139, 128
    %379 = vxpose.xlu0.b32.end [16/16] %v142, 128
    %v380 = vpop.trf.xlu0
    %v381 = vpop.trf.xlu0
    %v382 = vpop.trf.xlu0
    %v383 = vpop.trf.xlu0
    %v384 = vpop.trf.xlu0
    %v385 = vpop.trf.xlu0
    %v386 = vpop.trf.xlu0
    %v387 = vpop.trf.xlu0
    %v388 = vpop.trf.xlu0
    %v389 = vpop.trf.xlu0
    %v390 = vpop.trf.xlu0
    %v391 = vpop.trf.xlu0
    %v392 = vpop.trf.xlu0
    %v393 = vpop.trf.xlu0
    %v394 = vpop.trf.xlu0
    %v395 = vpop.trf.xlu0
    %396 = vxpose.xlu0.b32.start [1/16] %v98, 128
    %397 = vxpose.xlu0.b32.cont [2/16] %v101, 128
    %398 = vxpose.xlu0.b32.cont [3/16] %v104, 128
    %399 = vxpose.xlu0.b32.cont [4/16] %v107, 128
    %400 = vxpose.xlu0.b32.cont [5/16] %v110, 128
    %401 = vxpose.xlu0.b32.cont [6/16] %v113, 128
    %402 = vxpose.xlu0.b32.cont [7/16] %v116, 128
    %403 = vxpose.xlu0.b32.cont [8/16] %v119, 128
    %404 = vxpose.xlu0.b32.cont [9/16] %v122, 128
    %405 = vxpose.xlu0.b32.cont [10/16] %v125, 128
    %406 = vxpose.xlu0.b32.cont [11/16] %v128, 128
    %407 = vxpose.xlu0.b32.cont [12/16] %v131, 128
    %408 = vxpose.xlu0.b32.cont [13/16] %v134, 128
    %409 = vxpose.xlu0.b32.cont [14/16] %v137, 128
    %410 = vxpose.xlu0.b32.cont [15/16] %v140, 128
    %411 = vxpose.xlu0.b32.end [16/16] %v143, 128
    %v412 = vpop.trf.xlu0
    %v413 = vpop.trf.xlu0
    %v414 = vpop.trf.xlu0
    %v415 = vpop.trf.xlu0
    %v416 = vpop.trf.xlu0
    %v417 = vpop.trf.xlu0
    %v418 = vpop.trf.xlu0
    %v419 = vpop.trf.xlu0
    %v420 = vpop.trf.xlu0
    %v421 = vpop.trf.xlu0
    %v422 = vpop.trf.xlu0
    %v423 = vpop.trf.xlu0
    %v424 = vpop.trf.xlu0
    %v425 = vpop.trf.xlu0
    %v426 = vpop.trf.xlu0
    %v427 = vpop.trf.xlu0
    %428 = vxpose.xlu0.b32.start [1/16] %v99, 128
    %429 = vxpose.xlu0.b32.cont [2/16] %v102, 128
    %430 = vxpose.xlu0.b32.cont [3/16] %v105, 128
    %431 = vxpose.xlu0.b32.cont [4/16] %v108, 128
    %432 = vxpose.xlu0.b32.cont [5/16] %v111, 128
    %433 = vxpose.xlu0.b32.cont [6/16] %v114, 128
    %434 = vxpose.xlu0.b32.cont [7/16] %v117, 128
    %435 = vxpose.xlu0.b32.cont [8/16] %v120, 128
    %436 = vxpose.xlu0.b32.cont [9/16] %v123, 128
    %437 = vxpose.xlu0.b32.cont [10/16] %v126, 128
    %438 = vxpose.xlu0.b32.cont [11/16] %v129, 128
    %439 = vxpose.xlu0.b32.cont [12/16] %v132, 128
    %440 = vxpose.xlu0.b32.cont [13/16] %v135, 128
    %441 = vxpose.xlu0.b32.cont [14/16] %v138, 128
    %442 = vxpose.xlu0.b32.cont [15/16] %v141, 128
    %443 = vxpose.xlu0.b32.end [16/16] %v144, 128
    %v444 = vpop.trf.xlu0
    %v445 = vpop.trf.xlu0
    %v446 = vpop.trf.xlu0
    %v447 = vpop.trf.xlu0
    %v448 = vpop.trf.xlu0
    %v449 = vpop.trf.xlu0
    %v450 = vpop.trf.xlu0
    %v451 = vpop.trf.xlu0
    %v452 = vpop.trf.xlu0
    %v453 = vpop.trf.xlu0
    %v454 = vpop.trf.xlu0
    %v455 = vpop.trf.xlu0
    %v456 = vpop.trf.xlu0
    %v457 = vpop.trf.xlu0
    %v458 = vpop.trf.xlu0
    %v459 = vpop.trf.xlu0
    %460 = vxpose.xlu0.b32.start [1/16] %v145, 128
    %461 = vxpose.xlu0.b32.cont [2/16] %v148, 128
    %462 = vxpose.xlu0.b32.cont [3/16] %v151, 128
    %463 = vxpose.xlu0.b32.cont [4/16] %v154, 128
    %464 = vxpose.xlu0.b32.cont [5/16] %v157, 128
    %465 = vxpose.xlu0.b32.cont [6/16] %v160, 128
    %466 = vxpose.xlu0.b32.cont [7/16] %v163, 128
    %467 = vxpose.xlu0.b32.cont [8/16] %v166, 128
    %468 = vxpose.xlu0.b32.cont [9/16] %v169, 128
    %469 = vxpose.xlu0.b32.cont [10/16] 0.0, 128
    %470 = vxpose.xlu0.b32.cont [11/16] 0.0, 128
    %471 = vxpose.xlu0.b32.cont [12/16] 0.0, 128
    %472 = vxpose.xlu0.b32.cont [13/16] 0.0, 128
    %473 = vxpose.xlu0.b32.cont [14/16] 0.0, 128
    %474 = vxpose.xlu0.b32.cont [15/16] 0.0, 128
    %475 = vxpose.xlu0.b32.end [16/16] 0.0, 128
    %v476 = vpop.trf.xlu0
    %v477 = vpop.trf.xlu0
    %v478 = vpop.trf.xlu0
    %v479 = vpop.trf.xlu0
    %v480 = vpop.trf.xlu0
    %v481 = vpop.trf.xlu0
    %v482 = vpop.trf.xlu0
    %v483 = vpop.trf.xlu0
    %v484 = vpop.trf.xlu0
    %v485 = vpop.trf.xlu0
    %v486 = vpop.trf.xlu0
    %v487 = vpop.trf.xlu0
    %v488 = vpop.trf.xlu0
    %v489 = vpop.trf.xlu0
    %v490 = vpop.trf.xlu0
    %v491 = vpop.trf.xlu0
    %492 = vxpose.xlu0.b32.start [1/16] %v146, 128
    %493 = vxpose.xlu0.b32.cont [2/16] %v149, 128
    %494 = vxpose.xlu0.b32.cont [3/16] %v152, 128
    %495 = vxpose.xlu0.b32.cont [4/16] %v155, 128
    %496 = vxpose.xlu0.b32.cont [5/16] %v158, 128
    %497 = vxpose.xlu0.b32.cont [6/16] %v161, 128
    %498 = vxpose.xlu0.b32.cont [7/16] %v164, 128
    %499 = vxpose.xlu0.b32.cont [8/16] %v167, 128
    %500 = vxpose.xlu0.b32.cont [9/16] %v170, 128
    %501 = vxpose.xlu0.b32.cont [10/16] 0.0, 128
    %502 = vxpose.xlu0.b32.cont [11/16] 0.0, 128
    %503 = vxpose.xlu0.b32.cont [12/16] 0.0, 128
    %504 = vxpose.xlu0.b32.cont [13/16] 0.0, 128
    %505 = vxpose.xlu0.b32.cont [14/16] 0.0, 128
    %506 = vxpose.xlu0.b32.cont [15/16] 0.0, 128
    %507 = vxpose.xlu0.b32.end [16/16] 0.0, 128
    %v508 = vpop.trf.xlu0
    %v509 = vpop.trf.xlu0
    %v510 = vpop.trf.xlu0
    %v511 = vpop.trf.xlu0
    %v512 = vpop.trf.xlu0
    %v513 = vpop.trf.xlu0
    %v514 = vpop.trf.xlu0
    %v515 = vpop.trf.xlu0
    %v516 = vpop.trf.xlu0
    %v517 = vpop.trf.xlu0
    %v518 = vpop.trf.xlu0
    %v519 = vpop.trf.xlu0
    %v520 = vpop.trf.xlu0
    %v521 = vpop.trf.xlu0
    %v522 = vpop.trf.xlu0
    %v523 = vpop.trf.xlu0
    %524 = vxpose.xlu0.b32.start [1/16] %v147, 128
    %525 = vxpose.xlu0.b32.cont [2/16] %v150, 128
    %526 = vxpose.xlu0.b32.cont [3/16] %v153, 128
    %527 = vxpose.xlu0.b32.cont [4/16] %v156, 128
    %528 = vxpose.xlu0.b32.cont [5/16] %v159, 128
    %529 = vxpose.xlu0.b32.cont [6/16] %v162, 128
    %530 = vxpose.xlu0.b32.cont [7/16] %v165, 128
    %531 = vxpose.xlu0.b32.cont [8/16] %v168, 128
    %532 = vxpose.xlu0.b32.cont [9/16] %v171, 128
    %533 = vxpose.xlu0.b32.cont [10/16] 0.0, 128
    %534 = vxpose.xlu0.b32.cont [11/16] 0.0, 128
    %535 = vxpose.xlu0.b32.cont [12/16] 0.0, 128
    %536 = vxpose.xlu0.b32.cont [13/16] 0.0, 128
    %537 = vxpose.xlu0.b32.cont [14/16] 0.0, 128
    %538 = vxpose.xlu0.b32.cont [15/16] 0.0, 128
    %539 = vxpose.xlu0.b32.end [16/16] 0.0, 128
    %v540 = vpop.trf.xlu0
    %v541 = vpop.trf.xlu0
    %v542 = vpop.trf.xlu0
    %v543 = vpop.trf.xlu0
    %v544 = vpop.trf.xlu0
    %v545 = vpop.trf.xlu0
    %v546 = vpop.trf.xlu0
    %v547 = vpop.trf.xlu0
    %v548 = vpop.trf.xlu0
    %v549 = vpop.trf.xlu0
    %v550 = vpop.trf.xlu0
    %v551 = vpop.trf.xlu0
    %v552 = vpop.trf.xlu0
    %v553 = vpop.trf.xlu0
    %v554 = vpop.trf.xlu0
    %v555 = vpop.trf.xlu0
    %556 = vst [vmem:[%s1] sm:$0xff] %v188
    %vm557 = vcmask 588800
    %558 = vst.msk [vmem:[%s1 + $0x8] sm:$0xff] %vm557, %v284
    %559 = vst [vmem:[%s1 + $0x10] sm:$0xff] %v189
    %560 = vst.msk [vmem:[%s1 + $0x18] sm:$0xff] %vm557, %v285
    %561 = vst [vmem:[%s1 + $0x20] sm:$0xff] %v190
    %562 = vst.msk [vmem:[%s1 + $0x28] sm:$0xff] %vm557, %v286
    %563 = vst [vmem:[%s1 + $0x30] sm:$0xff] %v191
    %564 = vst.msk [vmem:[%s1 + $0x38] sm:$0xff] %vm557, %v287
    %565 = vst [vmem:[%s1 + $0x40] sm:$0xff] %v192
    %566 = vst.msk [vmem:[%s1 + $0x48] sm:$0xff] %vm557, %v288
    %567 = vst [vmem:[%s1 + $0x50] sm:$0xff] %v193
    %568 = vst.msk [vmem:[%s1 + $0x58] sm:$0xff] %vm557, %v289
    %569 = vst [vmem:[%s1 + $0x60] sm:$0xff] %v194
    %570 = vst.msk [vmem:[%s1 + $0x68] sm:$0xff] %vm557, %v290
    %571 = vst [vmem:[%s1 + $0x70] sm:$0xff] %v195
    %572 = vst.msk [vmem:[%s1 + $0x78] sm:$0xff] %vm557, %v291
    %573 = vst [vmem:[%s1 + $0x80] sm:$0xff] %v196
    %574 = vst.msk [vmem:[%s1 + $0x88] sm:$0xff] %vm557, %v292
    %575 = vst [vmem:[%s1 + $0x90] sm:$0xff] %v197
    %576 = vst.msk [vmem:[%s1 + $0x98] sm:$0xff] %vm557, %v293
    %577 = vst [vmem:[%s1 + $0xa0] sm:$0xff] %v198
    %578 = vst.msk [vmem:[%s1 + $0xa8] sm:$0xff] %vm557, %v294
    %579 = vst [vmem:[%s1 + $0xb0] sm:$0xff] %v199
    %580 = vst.msk [vmem:[%s1 + $0xb8] sm:$0xff] %vm557, %v295
    %581 = vst [vmem:[%s1 + $0xc0] sm:$0xff] %v200
    %582 = vst.msk [vmem:[%s1 + $0xc8] sm:$0xff] %vm557, %v296
    %583 = vst [vmem:[%s1 + $0xd0] sm:$0xff] %v201
    %584 = vst.msk [vmem:[%s1 + $0xd8] sm:$0xff] %vm557, %v297
    %585 = vst [vmem:[%s1 + $0xe0] sm:$0xff] %v202
    %586 = vst.msk [vmem:[%s1 + $0xe8] sm:$0xff] %vm557, %v298
    %587 = vst [vmem:[%s1 + $0xf0] sm:$0xff] %v203
    %588 = vst.msk [vmem:[%s1 + $0xf8] sm:$0xff] %vm557, %v299
    %589 = vst [vmem:[%s1 + $0x100] sm:$0xff] %v220
    %590 = vst.msk [vmem:[%s1 + $0x108] sm:$0xff] %vm557, %v316
    %591 = vst [vmem:[%s1 + $0x110] sm:$0xff] %v221
    %592 = vst.msk [vmem:[%s1 + $0x118] sm:$0xff] %vm557, %v317
    %593 = vst [vmem:[%s1 + $0x120] sm:$0xff] %v222
    %594 = vst.msk [vmem:[%s1 + $0x128] sm:$0xff] %vm557, %v318
    %595 = vst [vmem:[%s1 + $0x130] sm:$0xff] %v223
    %596 = vst.msk [vmem:[%s1 + $0x138] sm:$0xff] %vm557, %v319
    %597 = vst [vmem:[%s1 + $0x140] sm:$0xff] %v224
    %598 = vst.msk [vmem:[%s1 + $0x148] sm:$0xff] %vm557, %v320
    %599 = vst [vmem:[%s1 + $0x150] sm:$0xff] %v225
    %600 = vst.msk [vmem:[%s1 + $0x158] sm:$0xff] %vm557, %v321
    %601 = vst [vmem:[%s1 + $0x160] sm:$0xff] %v226
    %602 = vst.msk [vmem:[%s1 + $0x168] sm:$0xff] %vm557, %v322
    %603 = vst [vmem:[%s1 + $0x170] sm:$0xff] %v227
    %604 = vst.msk [vmem:[%s1 + $0x178] sm:$0xff] %vm557, %v323
    %605 = vst [vmem:[%s1 + $0x180] sm:$0xff] %v228
    %606 = vst.msk [vmem:[%s1 + $0x188] sm:$0xff] %vm557, %v324
    %607 = vst [vmem:[%s1 + $0x190] sm:$0xff] %v229
    %608 = vst.msk [vmem:[%s1 + $0x198] sm:$0xff] %vm557, %v325
    %609 = vst [vmem:[%s1 + $0x1a0] sm:$0xff] %v230
    %610 = vst.msk [vmem:[%s1 + $0x1a8] sm:$0xff] %vm557, %v326
    %611 = vst [vmem:[%s1 + $0x1b0] sm:$0xff] %v231
    %612 = vst.msk [vmem:[%s1 + $0x1b8] sm:$0xff] %vm557, %v327
    %613 = vst [vmem:[%s1 + $0x1c0] sm:$0xff] %v232
    %614 = vst.msk [vmem:[%s1 + $0x1c8] sm:$0xff] %vm557, %v328
    %615 = vst [vmem:[%s1 + $0x1d0] sm:$0xff] %v233
    %616 = vst.msk [vmem:[%s1 + $0x1d8] sm:$0xff] %vm557, %v329
    %617 = vst [vmem:[%s1 + $0x1e0] sm:$0xff] %v234
    %618 = vst.msk [vmem:[%s1 + $0x1e8] sm:$0xff] %vm557, %v330
    %619 = vst [vmem:[%s1 + $0x1f0] sm:$0xff] %v235
    %620 = vst.msk [vmem:[%s1 + $0x1f8] sm:$0xff] %vm557, %v331
    %621 = vst [vmem:[%s1 + $0x200] sm:$0xff] %v252
    %622 = vst.msk [vmem:[%s1 + $0x208] sm:$0xff] %vm557, %v348
    %623 = vst [vmem:[%s1 + $0x210] sm:$0xff] %v253
    %624 = vst.msk [vmem:[%s1 + $0x218] sm:$0xff] %vm557, %v349
    %625 = vst [vmem:[%s1 + $0x220] sm:$0xff] %v254
    %626 = vst.msk [vmem:[%s1 + $0x228] sm:$0xff] %vm557, %v350
    %627 = vst [vmem:[%s1 + $0x230] sm:$0xff] %v255
    %628 = vst.msk [vmem:[%s1 + $0x238] sm:$0xff] %vm557, %v351
    %629 = vst [vmem:[%s1 + $0x240] sm:$0xff] %v256
    %630 = vst.msk [vmem:[%s1 + $0x248] sm:$0xff] %vm557, %v352
    %631 = vst [vmem:[%s1 + $0x250] sm:$0xff] %v257
    %632 = vst.msk [vmem:[%s1 + $0x258] sm:$0xff] %vm557, %v353
    %633 = vst [vmem:[%s1 + $0x260] sm:$0xff] %v258
    %634 = vst.msk [vmem:[%s1 + $0x268] sm:$0xff] %vm557, %v354
    %635 = vst [vmem:[%s1 + $0x270] sm:$0xff] %v259
    %636 = vst.msk [vmem:[%s1 + $0x278] sm:$0xff] %vm557, %v355
    %637 = vst [vmem:[%s1 + $0x280] sm:$0xff] %v260
    %638 = vst.msk [vmem:[%s1 + $0x288] sm:$0xff] %vm557, %v356
    %639 = vst [vmem:[%s1 + $0x290] sm:$0xff] %v261
    %640 = vst.msk [vmem:[%s1 + $0x298] sm:$0xff] %vm557, %v357
    %641 = vst [vmem:[%s1 + $0x2a0] sm:$0xff] %v262
    %642 = vst.msk [vmem:[%s1 + $0x2a8] sm:$0xff] %vm557, %v358
    %643 = vst [vmem:[%s1 + $0x2b0] sm:$0xff] %v263
    %644 = vst.msk [vmem:[%s1 + $0x2b8] sm:$0xff] %vm557, %v359
    %645 = vst [vmem:[%s1 + $0x2c0] sm:$0xff] %v264
    %646 = vst.msk [vmem:[%s1 + $0x2c8] sm:$0xff] %vm557, %v360
    %647 = vst [vmem:[%s1 + $0x2d0] sm:$0xff] %v265
    %648 = vst.msk [vmem:[%s1 + $0x2d8] sm:$0xff] %vm557, %v361
    %649 = vst [vmem:[%s1 + $0x2e0] sm:$0xff] %v266
    %650 = vst.msk [vmem:[%s1 + $0x2e8] sm:$0xff] %vm557, %v362
    %651 = vst [vmem:[%s1 + $0x2f0] sm:$0xff] %v267
    %652 = vst.msk [vmem:[%s1 + $0x2f8] sm:$0xff] %vm557, %v363
    %653 = vst [vmem:[%s1 + $0x300] sm:$0xff] %v380
    %654 = vst.msk [vmem:[%s1 + $0x308] sm:$0xff] %vm557, %v476
    %655 = vst [vmem:[%s1 + $0x310] sm:$0xff] %v381
    %656 = vst.msk [vmem:[%s1 + $0x318] sm:$0xff] %vm557, %v477
    %657 = vst [vmem:[%s1 + $0x320] sm:$0xff] %v382
    %658 = vst.msk [vmem:[%s1 + $0x328] sm:$0xff] %vm557, %v478
    %659 = vst [vmem:[%s1 + $0x330] sm:$0xff] %v383
    %660 = vst.msk [vmem:[%s1 + $0x338] sm:$0xff] %vm557, %v479
    %661 = vst [vmem:[%s1 + $0x340] sm:$0xff] %v384
    %662 = vst.msk [vmem:[%s1 + $0x348] sm:$0xff] %vm557, %v480
    %663 = vst [vmem:[%s1 + $0x350] sm:$0xff] %v385
    %664 = vst.msk [vmem:[%s1 + $0x358] sm:$0xff] %vm557, %v481
    %665 = vst [vmem:[%s1 + $0x360] sm:$0xff] %v386
    %666 = vst.msk [vmem:[%s1 + $0x368] sm:$0xff] %vm557, %v482
    %667 = vst [vmem:[%s1 + $0x370] sm:$0xff] %v387
    %668 = vst.msk [vmem:[%s1 + $0x378] sm:$0xff] %vm557, %v483
    %669 = vst [vmem:[%s1 + $0x380] sm:$0xff] %v388
    %670 = vst.msk [vmem:[%s1 + $0x388] sm:$0xff] %vm557, %v484
    %671 = vst [vmem:[%s1 + $0x390] sm:$0xff] %v389
    %672 = vst.msk [vmem:[%s1 + $0x398] sm:$0xff] %vm557, %v485
    %673 = vst [vmem:[%s1 + $0x3a0] sm:$0xff] %v390
    %674 = vst.msk [vmem:[%s1 + $0x3a8] sm:$0xff] %vm557, %v486
    %675 = vst [vmem:[%s1 + $0x3b0] sm:$0xff] %v391
    %676 = vst.msk [vmem:[%s1 + $0x3b8] sm:$0xff] %vm557, %v487
    %677 = vst [vmem:[%s1 + $0x3c0] sm:$0xff] %v392
    %678 = vst.msk [vmem:[%s1 + $0x3c8] sm:$0xff] %vm557, %v488
    %679 = vst [vmem:[%s1 + $0x3d0] sm:$0xff] %v393
    %680 = vst.msk [vmem:[%s1 + $0x3d8] sm:$0xff] %vm557, %v489
    %681 = vst [vmem:[%s1 + $0x3e0] sm:$0xff] %v394
    %682 = vst.msk [vmem:[%s1 + $0x3e8] sm:$0xff] %vm557, %v490
    %683 = vst [vmem:[%s1 + $0x3f0] sm:$0xff] %v395
    %684 = vst.msk [vmem:[%s1 + $0x3f8] sm:$0xff] %vm557, %v491
    %685 = vst [vmem:[%s1 + $0x400] sm:$0xff] %v412
    %686 = vst.msk [vmem:[%s1 + $0x408] sm:$0xff] %vm557, %v508
    %687 = vst [vmem:[%s1 + $0x410] sm:$0xff] %v413
    %688 = vst.msk [vmem:[%s1 + $0x418] sm:$0xff] %vm557, %v509
    %689 = vst [vmem:[%s1 + $0x420] sm:$0xff] %v414
    %690 = vst.msk [vmem:[%s1 + $0x428] sm:$0xff] %vm557, %v510
    %691 = vst [vmem:[%s1 + $0x430] sm:$0xff] %v415
    %692 = vst.msk [vmem:[%s1 + $0x438] sm:$0xff] %vm557, %v511
    %693 = vst [vmem:[%s1 + $0x440] sm:$0xff] %v416
    %694 = vst.msk [vmem:[%s1 + $0x448] sm:$0xff] %vm557, %v512
    %695 = vst [vmem:[%s1 + $0x450] sm:$0xff] %v417
    %696 = vst.msk [vmem:[%s1 + $0x458] sm:$0xff] %vm557, %v513
    %697 = vst [vmem:[%s1 + $0x460] sm:$0xff] %v418
    %698 = vst.msk [vmem:[%s1 + $0x468] sm:$0xff] %vm557, %v514
    %699 = vst [vmem:[%s1 + $0x470] sm:$0xff] %v419
    %700 = vst.msk [vmem:[%s1 + $0x478] sm:$0xff] %vm557, %v515
    %701 = vst [vmem:[%s1 + $0x480] sm:$0xff] %v420
    %702 = vst.msk [vmem:[%s1 + $0x488] sm:$0xff] %vm557, %v516
    %703 = vst [vmem:[%s1 + $0x490] sm:$0xff] %v421
    %704 = vst.msk [vmem:[%s1 + $0x498] sm:$0xff] %vm557, %v517
    %705 = vst [vmem:[%s1 + $0x4a0] sm:$0xff] %v422
    %706 = vst.msk [vmem:[%s1 + $0x4a8] sm:$0xff] %vm557, %v518
    %707 = vst [vmem:[%s1 + $0x4b0] sm:$0xff] %v423
    %708 = vst.msk [vmem:[%s1 + $0x4b8] sm:$0xff] %vm557, %v519
    %709 = vst [vmem:[%s1 + $0x4c0] sm:$0xff] %v424
    %710 = vst.msk [vmem:[%s1 + $0x4c8] sm:$0xff] %vm557, %v520
    %711 = vst [vmem:[%s1 + $0x4d0] sm:$0xff] %v425
    %712 = vst.msk [vmem:[%s1 + $0x4d8] sm:$0xff] %vm557, %v521
    %713 = vst [vmem:[%s1 + $0x4e0] sm:$0xff] %v426
    %714 = vst.msk [vmem:[%s1 + $0x4e8] sm:$0xff] %vm557, %v522
    %715 = vst [vmem:[%s1 + $0x4f0] sm:$0xff] %v427
    %716 = vst.msk [vmem:[%s1 + $0x4f8] sm:$0xff] %vm557, %v523
    %717 = vst [vmem:[%s1 + $0x500] sm:$0xff] %v444
    %718 = vst.msk [vmem:[%s1 + $0x508] sm:$0xff] %vm557, %v540
    %719 = vst [vmem:[%s1 + $0x510] sm:$0xff] %v445
    %720 = vst.msk [vmem:[%s1 + $0x518] sm:$0xff] %vm557, %v541
    %721 = vst [vmem:[%s1 + $0x520] sm:$0xff] %v446
    %722 = vst.msk [vmem:[%s1 + $0x528] sm:$0xff] %vm557, %v542
    %723 = vst [vmem:[%s1 + $0x530] sm:$0xff] %v447
    %724 = vst.msk [vmem:[%s1 + $0x538] sm:$0xff] %vm557, %v543
    %725 = vst [vmem:[%s1 + $0x540] sm:$0xff] %v448
    %726 = vst.msk [vmem:[%s1 + $0x548] sm:$0xff] %vm557, %v544
    %727 = vst [vmem:[%s1 + $0x550] sm:$0xff] %v449
    %728 = vst.msk [vmem:[%s1 + $0x558] sm:$0xff] %vm557, %v545
    %729 = vst [vmem:[%s1 + $0x560] sm:$0xff] %v450
    %730 = vst.msk [vmem:[%s1 + $0x568] sm:$0xff] %vm557, %v546
    %731 = vst [vmem:[%s1 + $0x570] sm:$0xff] %v451
    %732 = vst.msk [vmem:[%s1 + $0x578] sm:$0xff] %vm557, %v547
    %733 = vst [vmem:[%s1 + $0x580] sm:$0xff] %v452
    %734 = vst.msk [vmem:[%s1 + $0x588] sm:$0xff] %vm557, %v548
    %735 = vst [vmem:[%s1 + $0x590] sm:$0xff] %v453
    %736 = vst.msk [vmem:[%s1 + $0x598] sm:$0xff] %vm557, %v549
    %737 = vst [vmem:[%s1 + $0x5a0] sm:$0xff] %v454
    %738 = vst.msk [vmem:[%s1 + $0x5a8] sm:$0xff] %vm557, %v550
    %739 = vst [vmem:[%s1 + $0x5b0] sm:$0xff] %v455
    %740 = vst.msk [vmem:[%s1 + $0x5b8] sm:$0xff] %vm557, %v551
    %741 = vst [vmem:[%s1 + $0x5c0] sm:$0xff] %v456
    %742 = vst.msk [vmem:[%s1 + $0x5c8] sm:$0xff] %vm557, %v552
    %743 = vst [vmem:[%s1 + $0x5d0] sm:$0xff] %v457
    %744 = vst.msk [vmem:[%s1 + $0x5d8] sm:$0xff] %vm557, %v553
    %745 = vst [vmem:[%s1 + $0x5e0] sm:$0xff] %v458
    %746 = vst.msk [vmem:[%s1 + $0x5e8] sm:$0xff] %vm557, %v554
    %747 = vst [vmem:[%s1 + $0x5f0] sm:$0xff] %v459
    %748 = vst.msk [vmem:[%s1 + $0x5f8] sm:$0xff] %vm557, %v555
    // Predicated region
    $region10: #{tpu_custom_call.1} parent=1 // pred_check
      _
    $region11: #{tpu_custom_call.1} parent=1 // pred_check_branch
      %750 = sbr.rel (0) target = $region13
    $region12: #{tpu_custom_call.1} parent=1 // pred_region
      _
    $region13: #{tpu_custom_call.1} parent=1 // pred_fallthru
      _
    // Predicated region
    $region14: #{tpu_custom_call.1} parent=1 // pred_check
      _
    $region15: #{tpu_custom_call.1} parent=1 // pred_check_branch
      %752 = sbr.rel (0) target = $region17
    $region16: #{tpu_custom_call.1} parent=1 // pred_region
      _
    $region17: #{tpu_custom_call.1} parent=1 // pred_fallthru
      _
    %753 = vsyncpa [#allocation3], 1

</llo_original>
